<compile_context>
chip_gen: v7x
topology: tpu7x:2x2x1
jax: 0.10.0
libtpu: 0.0.40
codegen_flags: <defaults>
</compile_context>

<pallas_src>
import jax
import jax.numpy as jnp
from jax.experimental import pallas as pl
from jax.experimental.pallas import tpu as pltpu

_LANES = 128


def _round_up(x, m):
    return (x + m - 1) // m * m


def _aligned_offsets(sizes, align=8):
    """Row offsets for packed segments, each start aligned to `align` rows."""
    offs, cur = [], 0
    for s in sizes:
        cur = _round_up(cur, align)
        offs.append(cur)
        cur += s
    return offs, _round_up(cur, align)


def _make_kernel(Din, D, Dout, offs):
    r_wa, r_ba, r_w1, r_w2, r_bc = offs

    def kernel(enc_ref, fh_ref, p_ref, out_ref):
        # enc_ref : (B, S, D)       encoder states (feature axis last -> lanes)
        # fh_ref  : (B, Din)        final hidden state
        # p_ref   : (rows_pad, 128) packed, lane-padded parameter slab:
        #             rows [r_wa, r_wa+Din) lanes [0,D)    : attn.weight.T
        #             row   r_ba            lanes [0,D)    : attn.bias
        #             rows [r_w1, r_w1+D)   lanes [0,Dout) : concat.W[:, :D].T
        #             rows [r_w2, r_w2+D)   lanes [0,Dout) : concat.W[:, D:].T
        #             row   r_bc            lanes [0,Dout) : concat.bias
        # out_ref : (B, Dout)
        waT = p_ref[r_wa:r_wa + Din, 0:D]          # (Din, D)
        ba = p_ref[r_ba:r_ba + 1, 0:D]             # (1, D)
        wc1T = p_ref[r_w1:r_w1 + D, 0:Dout]        # (D, Dout) -> multiplies context
        wc2T = p_ref[r_w2:r_w2 + D, 0:Dout]        # (D, Dout) -> multiplies final_state
        bc = p_ref[r_bc:r_bc + 1, 0:Dout]          # (1, Dout)

        # final_state = final_hidden @ W_attn.T + b_attn          -> (B, D)
        fs = jnp.dot(fh_ref[...], waT, preferred_element_type=jnp.float32) + ba

        enc = enc_ref[...]                                        # (B, S, D)

        # attn scores: lane-dense (B, S) via VPU broadcast-mul + last-axis reduce.
        scores = jnp.sum(enc * fs[:, None, :], axis=-1)           # (B, S)

        # softmax over the sequence axis (== dim=1 in PyTorch).
        m = jnp.max(scores, axis=-1, keepdims=True)               # (B, 1)
        e = jnp.exp(scores - m)                                   # (B, S)
        denom = jnp.sum(e, axis=-1, keepdims=True)                # (B, 1)
        w = e * pl.reciprocal(denom, approx=True)                 # (B, S)

        # context[b, d] = sum_s w[b, s] * enc[b, s, d]            -> (B, D)
        context = jnp.sum(w[:, :, None] * enc, axis=1)            # (B, D)

        # concat([context, fs]) @ W_cat.T + b == context @ Wc1T + fs @ Wc2T + b
        hid = (jnp.dot(context, wc1T, preferred_element_type=jnp.float32)
               + jnp.dot(fs, wc2T, preferred_element_type=jnp.float32)
               + bc)                                              # (B, Dout)
        out_ref[...] = jnp.maximum(hid, 0.0).astype(out_ref.dtype)

    return kernel


def self_attention_pallas(encoder_states, final_hidden_state,
                          w_attn, b_attn, w_cat, b_cat):
    B, S, D = encoder_states.shape
    Din = final_hidden_state.shape[1]
    Dout = w_cat.shape[0]

    # ---- host-side parameter packing into one lane-padded slab -------------
    offs, rows_pad = _aligned_offsets([Din, 1, D, D, 1], align=8)
    r_wa, r_ba, r_w1, r_w2, r_bc = offs
    params = jnp.zeros((rows_pad, _LANES), jnp.float32)
    params = params.at[r_wa:r_wa + Din, 0:D].set(w_attn.T)          # attn.weight.T
    params = params.at[r_ba, 0:D].set(b_attn)                       # attn.bias
    params = params.at[r_w1:r_w1 + D, 0:Dout].set(w_cat[:, :D].T)   # concat W half 1 (T)
    params = params.at[r_w2:r_w2 + D, 0:Dout].set(w_cat[:, D:].T)   # concat W half 2 (T)
    params = params.at[r_bc, 0:Dout].set(b_cat)                     # concat bias

    kernel = _make_kernel(Din, D, Dout, offs)

    return pl.pallas_call(
        kernel,
        out_shape=jax.ShapeDtypeStruct((B, Dout), jnp.float32),
        grid_spec=pltpu.PrefetchScalarGridSpec(
            num_scalar_prefetch=0,
            grid=(1,),  # whole (tiny) batch in one step: amortizes per-step overhead
            in_specs=[
                pl.BlockSpec((B, S, D), lambda i: (0, 0, 0)),        # encoder_states
                pl.BlockSpec((B, Din), lambda i: (0, 0)),            # final_hidden_state
                pl.BlockSpec((rows_pad, _LANES), lambda i: (0, 0)),  # packed params slab
            ],
            out_specs=pl.BlockSpec((B, Dout), lambda i: (0, 0)),
        ),
        compiler_params=pltpu.CompilerParams(
            dimension_semantics=("arbitrary",),
            vmem_limit_bytes=32 * 1024 * 1024,
        ),
    )(encoder_states, final_hidden_state, params)


def self_attention_ref(encoder_states, final_hidden_state,
                       w_attn, b_attn, w_cat, b_cat):
    fs = final_hidden_state @ w_attn.T + b_attn                       # (B, D)
    scores = jnp.einsum("bsd,bd->bs", encoder_states, fs)             # (B, S)
    w = jax.nn.softmax(scores, axis=1)                                # (B, S)
    context = jnp.einsum("bsd,bs->bd", encoder_states, w)             # (B, D)
    cat = jnp.concatenate([context, fs], axis=1)                      # (B, 2D)
    return jax.nn.relu(cat @ w_cat.T + b_cat)                         # (B, Dout)


if __name__ == "__main__":
    # module hyper-params
    size_in, size_out, fact = 32, 8, 2
    inter_med = size_in // fact            # D = 16
    B, S = 2, 8

    key = jax.random.PRNGKey(0)
    k_enc, k_fh, k_wa, k_ba, k_wc, k_bc = jax.random.split(key, 6)

    encoder_states = jax.random.normal(k_enc, (B, S, inter_med), jnp.float32)
    final_hidden_state = jax.random.normal(k_fh, (B, size_in), jnp.float32)

    # deterministic parameter init (PyTorch Linear shapes: W (out, in), b (out,))
    w_attn = jax.random.normal(k_wa, (inter_med, size_in), jnp.float32) * 0.1
    b_attn = jax.random.normal(k_ba, (inter_med,), jnp.float32) * 0.1
    w_cat = jax.random.normal(k_wc, (size_out, 2 * inter_med), jnp.float32) * 0.1
    b_cat = jax.random.normal(k_bc, (size_out,), jnp.float32) * 0.1

    out = self_attention_pallas(encoder_states, final_hidden_state,
                                w_attn, b_attn, w_cat, b_cat)
    out = jax.block_until_ready(out)

    ref = self_attention_ref(encoder_states, final_hidden_state,
                             w_attn, b_attn, w_cat, b_cat)
    assert out.shape == (B, size_out)
    # tolerance loosened vs. 1e-5: softmax denom uses approx reciprocal (EUP).
    assert jnp.allclose(out, ref, atol=1e-3, rtol=1e-3), "mismatch vs JAX reference"

    print("KERNEL_OK")
</pallas_src>

<mosaic_0001>
module attributes {stable_mosaic.version = 11 : i64} {
  func.func @kernel(%arg0: i32, %arg1: memref<2x8x16xf32, #tpu.memory_space<vmem>>, %arg2: memref<2x32xf32, #tpu.memory_space<vmem>>, %arg3: memref<80x128xf32, #tpu.memory_space<vmem>>, %arg4: memref<2x8xf32, #tpu.memory_space<vmem>>) attributes {dimension_semantics = [#tpu.dimension_semantics<arbitrary>], iteration_bounds = array<i64: 1>, scalar_prefetch = 0 : i64, scratch_operands = 0 : i64, tpu.core_type = #tpu.core_type<tc>, window_params = [{pipeline_mode = #tpu.pipeline_mode<synchronous>, transform_indices = @transform_0, window_bounds = array<i64: 2, 8, 16>}, {pipeline_mode = #tpu.pipeline_mode<synchronous>, transform_indices = @transform_1, window_bounds = array<i64: 2, 32>}, {pipeline_mode = #tpu.pipeline_mode<synchronous>, transform_indices = @transform_2, window_bounds = array<i64: 80, 128>}, {pipeline_mode = #tpu.pipeline_mode<synchronous>, transform_indices = @transform_3, window_bounds = array<i64: 2, 8>}]} {
    %c0 = arith.constant 0 : index
    %c0_0 = arith.constant 0 : index
    %0 = vector.load %arg3[%c0, %c0_0] : memref<80x128xf32, #tpu.memory_space<vmem>>, vector<32x16xf32>
    %c32 = arith.constant 32 : index
    %c0_1 = arith.constant 0 : index
    %1 = vector.load %arg3[%c32, %c0_1] : memref<80x128xf32, #tpu.memory_space<vmem>>, vector<1x16xf32>
    %c40 = arith.constant 40 : index
    %c0_2 = arith.constant 0 : index
    %2 = vector.load %arg3[%c40, %c0_2] : memref<80x128xf32, #tpu.memory_space<vmem>>, vector<16x8xf32>
    %c56 = arith.constant 56 : index
    %c0_3 = arith.constant 0 : index
    %3 = vector.load %arg3[%c56, %c0_3] : memref<80x128xf32, #tpu.memory_space<vmem>>, vector<16x8xf32>
    %c72 = arith.constant 72 : index
    %c0_4 = arith.constant 0 : index
    %4 = vector.load %arg3[%c72, %c0_4] : memref<80x128xf32, #tpu.memory_space<vmem>>, vector<1x8xf32>
    %c0_5 = arith.constant 0 : index
    %c0_6 = arith.constant 0 : index
    %5 = vector.load %arg2[%c0_5, %c0_6] : memref<2x32xf32, #tpu.memory_space<vmem>>, vector<2x32xf32>
    %cst = arith.constant dense<0.000000e+00> : vector<2x16xf32>
    %6 = tpu.matmul %5, %0, %cst {dimension_numbers = #tpu.dot_dimension_numbers<[1], [0], [0], [1], [0, 0, 1, 1], [], []>} : vector<2x32xf32>, vector<32x16xf32>, vector<2x16xf32> -> vector<2x16xf32>
    %7 = vector.broadcast %1 : vector<1x16xf32> to vector<2x16xf32>
    %8 = arith.addf %6, %7 : vector<2x16xf32>
    %c0_7 = arith.constant 0 : index
    %c0_8 = arith.constant 0 : index
    %c0_9 = arith.constant 0 : index
    %9 = vector.load %arg1[%c0_7, %c0_8, %c0_9] : memref<2x8x16xf32, #tpu.memory_space<vmem>>, vector<2x8x16xf32>
    %10 = vector.shape_cast %8 : vector<2x16xf32> to vector<2x1x16xf32>
    %11 = vector.broadcast %10 : vector<2x1x16xf32> to vector<2x8x16xf32>
    %12 = arith.mulf %9, %11 : vector<2x8x16xf32>
    %cst_10 = arith.constant dense<0.000000e+00> : vector<2x8xf32>
    %13 = vector.multi_reduction <add>, %12, %cst_10 [2] : vector<2x8x16xf32> to vector<2x8xf32>
    %cst_11 = arith.constant dense<0xFF800000> : vector<2xf32>
    %14 = vector.multi_reduction <maximumf>, %13, %cst_11 [1] : vector<2x8xf32> to vector<2xf32>
    %15 = vector.shape_cast %14 : vector<2xf32> to vector<2x1xf32>
    %16 = vector.broadcast %15 : vector<2x1xf32> to vector<2x8xf32>
    %17 = arith.subf %13, %16 : vector<2x8xf32>
    %18 = math.exp %17 : vector<2x8xf32>
    %cst_12 = arith.constant dense<0.000000e+00> : vector<2xf32>
    %19 = vector.multi_reduction <add>, %18, %cst_12 [1] : vector<2x8xf32> to vector<2xf32>
    %20 = vector.shape_cast %19 : vector<2xf32> to vector<2x1xf32>
    %21 = tpu.reciprocal %20 {approx = true} : vector<2x1xf32> -> vector<2x1xf32>
    %22 = vector.broadcast %21 : vector<2x1xf32> to vector<2x8xf32>
    %23 = arith.mulf %18, %22 : vector<2x8xf32>
    %24 = vector.shape_cast %23 : vector<2x8xf32> to vector<2x8x1xf32>
    %25 = vector.broadcast %24 : vector<2x8x1xf32> to vector<2x8x16xf32>
    %26 = arith.mulf %25, %9 : vector<2x8x16xf32>
    %cst_13 = arith.constant dense<0.000000e+00> : vector<2x16xf32>
    %27 = vector.multi_reduction <add>, %26, %cst_13 [1] : vector<2x8x16xf32> to vector<2x16xf32>
    %cst_14 = arith.constant dense<0.000000e+00> : vector<2x8xf32>
    %28 = tpu.matmul %27, %2, %cst_14 {dimension_numbers = #tpu.dot_dimension_numbers<[1], [0], [0], [1], [0, 0, 1, 1], [], []>} : vector<2x16xf32>, vector<16x8xf32>, vector<2x8xf32> -> vector<2x8xf32>
    %cst_15 = arith.constant dense<0.000000e+00> : vector<2x8xf32>
    %29 = tpu.matmul %8, %3, %cst_15 {dimension_numbers = #tpu.dot_dimension_numbers<[1], [0], [0], [1], [0, 0, 1, 1], [], []>} : vector<2x16xf32>, vector<16x8xf32>, vector<2x8xf32> -> vector<2x8xf32>
    %30 = arith.addf %28, %29 : vector<2x8xf32>
    %31 = vector.broadcast %4 : vector<1x8xf32> to vector<2x8xf32>
    %32 = arith.addf %30, %31 : vector<2x8xf32>
    %cst_16 = arith.constant 0.000000e+00 : f32
    %33 = vector.broadcast %cst_16 : f32 to vector<2x8xf32>
    %34 = arith.maximumf %32, %33 : vector<2x8xf32>
    %c0_17 = arith.constant 0 : index
    %c0_18 = arith.constant 0 : index
    %35 = vector.load %arg4[%c0_17, %c0_18] : memref<2x8xf32, #tpu.memory_space<vmem>>, vector<2x8xf32>
    tpu.vector_store %arg4[%c0_17, %c0_18], %34 {strides = array<i32>} : memref<2x8xf32, #tpu.memory_space<vmem>>, vector<2x8xf32>,
    return
  }
  func.func @transform_0(%arg0: i32) -> (i32, i32, i32) {
    %c0_i32 = arith.constant 0 : i32
    %c0_i32_0 = arith.constant 0 : i32
    %c0_i32_1 = arith.constant 0 : i32
    %c0_i32_2 = arith.constant 0 : i32
    return %c0_i32, %c0_i32_0, %c0_i32_1 : i32, i32, i32
  }
  func.func @transform_1(%arg0: i32) -> (i32, i32) {
    %c0_i32 = arith.constant 0 : i32
    %c0_i32_0 = arith.constant 0 : i32
    %c0_i32_1 = arith.constant 0 : i32
    return %c0_i32, %c0_i32_0 : i32, i32
  }
  func.func @transform_2(%arg0: i32) -> (i32, i32) {
    %c0_i32 = arith.constant 0 : i32
    %c0_i32_0 = arith.constant 0 : i32
    %c0_i32_1 = arith.constant 0 : i32
    return %c0_i32, %c0_i32_0 : i32, i32
  }
  func.func @transform_3(%arg0: i32) -> (i32, i32) {
    %c0_i32 = arith.constant 0 : i32
    %c0_i32_0 = arith.constant 0 : i32
    %c0_i32_1 = arith.constant 0 : i32
    return %c0_i32, %c0_i32_0 : i32, i32
  }
}

</mosaic_0001>

<llo_original>
// kernel: tpu_custom_call.1
$region0: #{tpu_custom_call.1}
  #allocation0 [shape = 'u32[]', space=smem, size = 0x4, offset = 0x4, fixed_abs, tag = 'smem constant byte address 0x4 - core index']
  #allocation1 [shape = 'u32[144,128]{1,0:T(1,128)}', space=vmem, size = 0x12000, scoped, tag = 'internal scratch']
  %s0 = inlined_call_operand.hbm [shape: f32[2,8,16], index: 0, kind: input, shape index: {}]
  %s1 = inlined_call_operand.vmem [shape: f32[2,32], index: 1, kind: input, shape index: {}]
  %s2 = inlined_call_operand.hbm [shape: f32[80,128], index: 2, kind: input, shape index: {}]
  %s3 = inlined_call_operand.hbm [shape: f32[2,8], index: 3, kind: output, shape index: {}]
  %s4 = sld [smem:[#allocation0]]
  $region30: #{tpu_custom_call.1} parent=0
    _
  %s6 = ssub.s32 1, %s4
  %s7 = scalar_select 0, %s6, %s4
  $region1: #{tpu_custom_call.1} parent=0
    #allocation2 [shape = 'u8[8192]{0}', space=vmem, size = 0x2000, scoped, tag = 'input window, operand 0, single buffered']
    #allocation3 [shape = 's32[1]{0}', space=sflag, size = 0x4, scoped, tag = 'scoped memory for tpu_custom_call.1']
    #allocation4 [shape = 's32[1]{0}', space=sflag, size = 0x4, scoped, tag = 'scoped memory for tpu_custom_call.1']
    #allocation5 [shape = 'u8[40960]{0}', space=vmem, size = 0xa000, scoped, tag = 'input window, operand 2, single buffered']
    #allocation6 [shape = 's32[1]{0}', space=sflag, size = 0x4, scoped, tag = 'scoped memory for tpu_custom_call.1']
    #allocation7 [shape = 'u8[1024]{0}', space=vmem, size = 0x400, scoped, tag = 'output window, operand 0, single buffered']
    %8 = vsyncpa [#allocation3], 0
    %9 = vsyncpa [#allocation6], 0
    %10 = vsyncpa [#allocation4], 0
    // Predicated region
    $region2: #{tpu_custom_call.1} parent=1 // pred_check
      _
    $region3: #{tpu_custom_call.1} parent=1 // pred_check_branch
      %12 = sbr.rel (0) target = $region5
    $region4: #{tpu_custom_call.1} parent=1 // pred_region
      %s14 = ssub.s32 256, 256
      %15 = vsyncadd [#allocation3], %s14
      %s16 = sshll.u32 [#allocation2], 4
      %s17 = int_to_ptr.vmem [resolvable:$true] %s16
      %22 = dma.hbm_to_vmem [thread:$0]  %s0, 256, %s17, [#allocation3], 128, 128, 8
    $region5: #{tpu_custom_call.1} parent=1 // pred_fallthru
      _
    // Predicated region
    $region6: #{tpu_custom_call.1} parent=1 // pred_check
      _
    $region7: #{tpu_custom_call.1} parent=1 // pred_check_branch
      %24 = sbr.rel (0) target = $region9
    $region8: #{tpu_custom_call.1} parent=1 // pred_region
      _
    $region9: #{tpu_custom_call.1} parent=1 // pred_fallthru
      _
    // Predicated region
    $region10: #{tpu_custom_call.1} parent=1 // pred_check
      _
    $region11: #{tpu_custom_call.1} parent=1 // pred_check_branch
      %26 = sbr.rel (0) target = $region13
    $region12: #{tpu_custom_call.1} parent=1 // pred_region
      %s28 = ssub.s32 1280, 1280
      %29 = vsyncadd [#allocation6], %s28
      %s30 = sshll.u32 [#allocation5], 4
      %s31 = int_to_ptr.vmem [resolvable:$true] %s30
      %36 = dma.hbm_to_vmem [thread:$0]  %s2, 1280, %s31, [#allocation6], 128, 128, 8
    $region13: #{tpu_custom_call.1} parent=1 // pred_fallthru
      _
    // Predicated region
    $region14: #{tpu_custom_call.1} parent=1 // pred_check
      _
    $region15: #{tpu_custom_call.1} parent=1 // pred_check_branch
      %38 = sbr.rel (0) target = $region17
    $region16: #{tpu_custom_call.1} parent=1 // pred_region
      %39 = dma.done [#allocation3], 256
    $region17: #{tpu_custom_call.1} parent=1 // pred_fallthru
      _
    // Predicated region
    $region18: #{tpu_custom_call.1} parent=1 // pred_check
      _
    $region19: #{tpu_custom_call.1} parent=1 // pred_check_branch
      %41 = sbr.rel (0) target = $region21
    $region20: #{tpu_custom_call.1} parent=1 // pred_region
      %42 = dma.done [#allocation6], 1280
    $region21: #{tpu_custom_call.1} parent=1 // pred_fallthru
      _
    %v43 = vld [vmem:[#allocation5] sm:$0xff]
    %v44 = vld [vmem:[#allocation5 + $0x8] sm:$0xff]
    %v45 = vld [vmem:[#allocation5 + $0x10] sm:$0xff]
    %v46 = vld [vmem:[#allocation5 + $0x18] sm:$0xff]
    %v47 = vld [vmem:[#allocation5 + $0x20] sm:$0x1]
    %v48 = vld [vmem:[#allocation5 + $0x28] sm:$0xff]
    %v49 = vld [vmem:[#allocation5 + $0x30] sm:$0xff]
    %v50 = vld [vmem:[#allocation5 + $0x38] sm:$0xff]
    %v51 = vld [vmem:[#allocation5 + $0x40] sm:$0xff]
    %v52 = vld [vmem:[#allocation5 + $0x48] sm:$0x1]
    %v53 = vld [vmem:[%s1] sm:$0x3]
    %v54 = vlaneseq
    %v55 = vshrl.u32 %v54, 7
    %v56 = vsub.s32 0, %v55
    %v57 = vrot.slane %v47, %v56
    %vm58 = vcmask 261120
    %v60 = vsel %vm58, %v53, 0
    %62 = vmatprep.subr.mxu0 0.0
    %63 = vmatpush1.msra.mxu0 %v43
    %64 = vmatprep.subr.mxu0 0.0
    %65 = vmatpush1.msra.mxu0 %v44
    %66 = vmatprep.subr.mxu0 0.0
    %67 = vmatpush1.msra.mxu0 %v45
    %68 = vmatprep.subr.mxu0 0.0
    %69 = vmatpush1.msra.mxu0 %v46
    %70 = vmatprep.subr.mxu0 0.0
    %71 = vmatpush1.msra.mxu0 0.0
    %72 = vmatprep.subr.mxu0 0.0
    %73 = vmatpush1.msra.mxu0 0.0
    %74 = vmatprep.subr.mxu0 0.0
    %75 = vmatpush1.msra.mxu0 0.0
    %76 = vmatprep.subr.mxu0 0.0
    %77 = vmatpush1.msra.mxu0 0.0
    %78 = vmatprep.subr.mxu0 0.0
    %79 = vmatpush1.msra.mxu0 0.0
    %80 = vmatprep.subr.mxu0 0.0
    %81 = vmatpush1.msra.mxu0 0.0
    %82 = vmatprep.subr.mxu0 0.0
    %83 = vmatpush1.msra.mxu0 0.0
    %84 = vmatprep.subr.mxu0 0.0
    %85 = vmatpush1.msra.mxu0 0.0
    %86 = vmatprep.subr.mxu0 0.0
    %87 = vmatpush1.msra.mxu0 0.0
    %88 = vmatprep.subr.mxu0 0.0
    %89 = vmatpush1.msra.mxu0 0.0
    %90 = vmatprep.subr.mxu0 0.0
    %91 = vmatpush1.msra.mxu0 0.0
    %92 = vmatprep.subr.mxu0 0.0
    %93 = vmatpush1.msra.mxu0 0.0
    %94 = vmatprep.subr.mxu0 0.0
    %95 = vmatpush1.msra.mxu0 0.0
    %96 = vmatprep.subr.mxu0 0.0
    %97 = vmatpush1.msra.mxu0 0.0
    %98 = vmatprep.subr.mxu0 0.0
    %99 = vmatpush1.msra.mxu0 0.0
    %100 = vmatprep.subr.mxu0 0.0
    %101 = vmatpush1.msra.mxu0 0.0
    %102 = vmatprep.subr.mxu0 0.0
    %103 = vmatpush1.msra.mxu0 0.0
    %104 = vmatprep.subr.mxu0 0.0
    %105 = vmatpush1.msra.mxu0 0.0
    %106 = vmatprep.subr.mxu0 0.0
    %107 = vmatpush1.msra.mxu0 0.0
    %108 = vmatprep.subr.mxu0 0.0
    %109 = vmatpush1.msra.mxu0 0.0
    %110 = vmatprep.subr.mxu0 0.0
    %111 = vmatpush1.msra.mxu0 0.0
    %112 = vmatprep.subr.mxu0 0.0
    %113 = vmatpush1.msra.mxu0 0.0
    %114 = vmatprep.subr.mxu0 0.0
    %115 = vmatpush1.msra.mxu0 0.0
    %116 = vmatprep.subr.mxu0 0.0
    %117 = vmatpush1.msra.mxu0 0.0
    %118 = vmatprep.subr.mxu0 0.0
    %119 = vmatpush1.msra.mxu0 0.0
    %120 = vmatprep.subr.mxu0 0.0
    %121 = vmatpush1.msra.mxu0 0.0
    %122 = vmatprep.subr.mxu0 0.0
    %123 = vmatpush1.msra.mxu0 0.0
    %124 = vmatprep.subr.mxu0 0.0
    %125 = vmatpush1.msra.mxu0 0.0
    %126 = vmatprep.mubr.f32.mxu0 0.0
    %127 = vmatmul.mubr.f32.gmra.mrb[0].mxu0 %v60
    %v128 = vpop.f32.mrb[0].mxu0
    %v129 = vadd.f32 %v57, %v128
    %v130 = vpop.f32.mrb[0].mxu0
    %131 = vdwg.mxu0
    %v132 = vld [vmem:[#allocation2] sm:$0xff]
    %v133 = vld [vmem:[#allocation2 + $0x8] sm:$0xff]
    %v136 = vunpack.c.l.s4 1966171168
    %v137 = vunpack.c.0.s8 %v136
    %v138 = vlaneseq
    %v139 = vshrl.u32 %v138, 7
    %v140 = vsub.s32 %v137, %v139
    %v141 = vrot.slane %v129, %v140
    %v142 = vcombine.high %v141, %v141
    %v144 = vunpack.c.l.s4 1966171168
    %v145 = vunpack.c.0.s8 %v144
    %v146 = vlaneseq
    %v147 = vshrl.u32 %v146, 7
    %v148 = vsub.s32 %v145, %v147
    %v149 = vrot.slane %v141, %v148
    %v151 = vunpack.c.l.s4 1966171168
    %v152 = vunpack.c.0.s8 %v151
    %v153 = vlaneseq
    %v154 = vshrl.u32 %v153, 7
    %v155 = vsub.s32 %v152, %v154
    %v156 = vrot.slane %v142, %v155
    %v157 = vlaneseq
    %v158 = vshrl.u32 %v157, 7
    %v159 = vsub.s32 0, %v158
    %v160 = vrot.slane %v149, %v159
    %v161 = vlaneseq
    %v162 = vshrl.u32 %v161, 7
    %v163 = vsub.s32 0, %v162
    %v164 = vrot.slane %v156, %v163
    %v167 = vmul.f32 %v132, %v160
    %v168 = vmul.f32 %v133, %v164
    %vm169 = vcmask 130048
    %v170 = vsel %vm169, %v167, 0.0
    %171 = vadd.xlane.f32.xlu0 %v170
    %v172 = vpop.xlane.xlu0 %171
    %v173 = vsel %vm169, %v168, 0.0
    %174 = vadd.xlane.f32.xlu0 %v173
    %v175 = vpop.xlane.xlu0 %174
    %v178 = vlaneseq
    %v179 = vand.u32 %v178, 127
    %v180 = vlaneseq
    %v181 = vshrl.u32 %v180, 7
    %v182 = vsub.s32 %v179, %v181
    %v183 = vrot.slane %v172, %v182
    %v184 = vlaneseq
    %v185 = vshrl.u32 %v184, 7
    %v186 = vsub.s32 %v179, %v185
    %v187 = vrot.slane %v175, %v186
    %vm188 = vcmask 1041409
    %v189 = vsel %vm188, %v187, %v183
    %vm191 = vcmask 58368
    %v192 = vsel %vm191, %v189, -inf
    %193 = vmax.xlane.f32.xlu0 %v192
    %v194 = vpop.xlane.xlu0 %193
    %v196 = vlaneseq
    %v197 = vshrl.u32 %v196, 7
    %v198 = vsub.s32 0, %v197
    %v199 = vrot.slane %v194, %v198
    %v200 = vlaneseq
    %v201 = vshrl.u32 %v200, 7
    %v202 = vsub.s32 1, %v201
    %v203 = vrot.slane %v194, %v202
    %v206 = vsub.f32 %v172, %v199
    %v207 = vsub.f32 %v175, %v203
    %v208 = vmul.f32 %v206, 1.442695
    %v209 = vpow.pop %v208
    %v210 = vmul.f32 %v207, 1.442695
    %v211 = vpow.pop %v210
    %214 = vset.pattern.permute.xlu0 0
    %215 = vperm.xlu0 %214, %v209
    %v216 = vpop.permute.xlu0 %215
    %217 = vset.pattern.permute.xlu0 0
    %218 = vperm.xlu0 %217, %v211
    %v219 = vpop.permute.xlu0 %218
    %v220 = vlaneseq
    %v221 = vshrl.u32 %v220, 7
    %v222 = vsub.s32 %v179, %v221
    %v223 = vrot.slane %v216, %v222
    %v224 = vlaneseq
    %v225 = vshrl.u32 %v224, 7
    %v226 = vsub.s32 %v179, %v225
    %v227 = vrot.slane %v219, %v226
    %v228 = vsel %vm188, %v227, %v223
    %v230 = vsel %vm191, %v228, 0.0
    %231 = vadd.xlane.f32.xlu0 %v230
    %v232 = vpop.xlane.xlu0 %231
    %v233 = vrcp.pop %v232
    %v235 = vlaneseq
    %v236 = vshrl.u32 %v235, 7
    %v237 = vsub.s32 0, %v236
    %v238 = vrot.slane %v233, %v237
    %v239 = vlaneseq
    %v240 = vshrl.u32 %v239, 7
    %v241 = vsub.s32 1, %v240
    %v242 = vrot.slane %v233, %v241
    %v245 = vmul.f32 %v209, %v238
    %v246 = vmul.f32 %v211, %v242
    %248 = vset.pattern.permute.xlu0 0
    %249 = vperm.xlu0 %248, %v245
    %v250 = vpop.permute.xlu0 %249
    %253 = vset.pattern.permute.xlu0 0
    %254 = vperm.xlu0 %253, %v246
    %v255 = vpop.permute.xlu0 %254
    %v257 = vmul.f32 %v250, %v132
    %v258 = vmul.f32 %v255, %v133
    %v259 = vsel %vm169, %v257, 0.0
    %v260 = vrot.slane %v259, 4
    %v261 = vadd.f32 %v259, %v260
    %v262 = vrot.slane %v261, 2
    %v263 = vadd.f32 %v261, %v262
    %v264 = vrot.slane %v263, 1
    %v265 = vadd.f32 %v263, %v264
    %v266 = vsel %vm169, %v258, 0.0
    %v267 = vrot.slane %v266, 4
    %v268 = vadd.f32 %v266, %v267
    %v269 = vrot.slane %v268, 2
    %v270 = vadd.f32 %v268, %v269
    %v271 = vrot.slane %v270, 1
    %v272 = vadd.f32 %v270, %v271
    %v273 = vsel %vm169, %v129, 0
    %275 = vmatprep.subr.mxu0 0.0
    %276 = vmatpush1.msra.mxu0 %v50
    %277 = vmatprep.subr.mxu0 0.0
    %278 = vmatpush1.msra.mxu0 %v51
    %279 = vmatprep.subr.mxu0 0.0
    %280 = vmatpush1.msra.mxu0 0.0
    %281 = vmatprep.subr.mxu0 0.0
    %282 = vmatpush1.msra.mxu0 0.0
    %283 = vmatprep.subr.mxu0 0.0
    %284 = vmatpush1.msra.mxu0 0.0
    %285 = vmatprep.subr.mxu0 0.0
    %286 = vmatpush1.msra.mxu0 0.0
    %287 = vmatprep.subr.mxu0 0.0
    %288 = vmatpush1.msra.mxu0 0.0
    %289 = vmatprep.subr.mxu0 0.0
    %290 = vmatpush1.msra.mxu0 0.0
    %291 = vmatprep.subr.mxu0 0.0
    %292 = vmatpush1.msra.mxu0 0.0
    %293 = vmatprep.subr.mxu0 0.0
    %294 = vmatpush1.msra.mxu0 0.0
    %295 = vmatprep.subr.mxu0 0.0
    %296 = vmatpush1.msra.mxu0 0.0
    %297 = vmatprep.subr.mxu0 0.0
    %298 = vmatpush1.msra.mxu0 0.0
    %299 = vmatprep.subr.mxu0 0.0
    %300 = vmatpush1.msra.mxu0 0.0
    %301 = vmatprep.subr.mxu0 0.0
    %302 = vmatpush1.msra.mxu0 0.0
    %303 = vmatprep.subr.mxu0 0.0
    %304 = vmatpush1.msra.mxu0 0.0
    %305 = vmatprep.subr.mxu0 0.0
    %306 = vmatpush1.msra.mxu0 0.0
    %307 = vmatprep.subr.mxu0 0.0
    %308 = vmatpush1.msra.mxu0 0.0
    %309 = vmatprep.subr.mxu0 0.0
    %310 = vmatpush1.msra.mxu0 0.0
    %311 = vmatprep.subr.mxu0 0.0
    %312 = vmatpush1.msra.mxu0 0.0
    %313 = vmatprep.subr.mxu0 0.0
    %314 = vmatpush1.msra.mxu0 0.0
    %315 = vmatprep.subr.mxu0 0.0
    %316 = vmatpush1.msra.mxu0 0.0
    %317 = vmatprep.subr.mxu0 0.0
    %318 = vmatpush1.msra.mxu0 0.0
    %319 = vmatprep.subr.mxu0 0.0
    %320 = vmatpush1.msra.mxu0 0.0
    %321 = vmatprep.subr.mxu0 0.0
    %322 = vmatpush1.msra.mxu0 0.0
    %323 = vmatprep.subr.mxu0 0.0
    %324 = vmatpush1.msra.mxu0 0.0
    %325 = vmatprep.subr.mxu0 0.0
    %326 = vmatpush1.msra.mxu0 0.0
    %327 = vmatprep.subr.mxu0 0.0
    %328 = vmatpush1.msra.mxu0 0.0
    %329 = vmatprep.subr.mxu0 0.0
    %330 = vmatpush1.msra.mxu0 0.0
    %331 = vmatprep.subr.mxu0 0.0
    %332 = vmatpush1.msra.mxu0 0.0
    %333 = vmatprep.subr.mxu0 0.0
    %334 = vmatpush1.msra.mxu0 0.0
    %335 = vmatprep.subr.mxu0 0.0
    %336 = vmatpush1.msra.mxu0 0.0
    %337 = vmatprep.subr.mxu0 0.0
    %338 = vmatpush1.msra.mxu0 0.0
    %339 = vmatprep.mubr.f32.mxu0 0.0
    %340 = vmatmul.mubr.f32.gmra.mrb[0].mxu0 %v273
    %v341 = vpop.f32.mrb[0].mxu0
    %v342 = vadd.f32 0.0, %v341
    %v343 = vpop.f32.mrb[0].mxu0
    %344 = vdwg.mxu0
    %v347 = vsel %vm188, %v272, %v265
    %v348 = vsel %vm169, %v347, 0
    %350 = vmatprep.subr.mxu0 0.0
    %351 = vmatpush1.msra.mxu0 %v48
    %352 = vmatprep.subr.mxu0 0.0
    %353 = vmatpush1.msra.mxu0 %v49
    %354 = vmatprep.subr.mxu0 0.0
    %355 = vmatpush1.msra.mxu0 0.0
    %356 = vmatprep.subr.mxu0 0.0
    %357 = vmatpush1.msra.mxu0 0.0
    %358 = vmatprep.subr.mxu0 0.0
    %359 = vmatpush1.msra.mxu0 0.0
    %360 = vmatprep.subr.mxu0 0.0
    %361 = vmatpush1.msra.mxu0 0.0
    %362 = vmatprep.subr.mxu0 0.0
    %363 = vmatpush1.msra.mxu0 0.0
    %364 = vmatprep.subr.mxu0 0.0
    %365 = vmatpush1.msra.mxu0 0.0
    %366 = vmatprep.subr.mxu0 0.0
    %367 = vmatpush1.msra.mxu0 0.0
    %368 = vmatprep.subr.mxu0 0.0
    %369 = vmatpush1.msra.mxu0 0.0
    %370 = vmatprep.subr.mxu0 0.0
    %371 = vmatpush1.msra.mxu0 0.0
    %372 = vmatprep.subr.mxu0 0.0
    %373 = vmatpush1.msra.mxu0 0.0
    %374 = vmatprep.subr.mxu0 0.0
    %375 = vmatpush1.msra.mxu0 0.0
    %376 = vmatprep.subr.mxu0 0.0
    %377 = vmatpush1.msra.mxu0 0.0
    %378 = vmatprep.subr.mxu0 0.0
    %379 = vmatpush1.msra.mxu0 0.0
    %380 = vmatprep.subr.mxu0 0.0
    %381 = vmatpush1.msra.mxu0 0.0
    %382 = vmatprep.subr.mxu0 0.0
    %383 = vmatpush1.msra.mxu0 0.0
    %384 = vmatprep.subr.mxu0 0.0
    %385 = vmatpush1.msra.mxu0 0.0
    %386 = vmatprep.subr.mxu0 0.0
    %387 = vmatpush1.msra.mxu0 0.0
    %388 = vmatprep.subr.mxu0 0.0
    %389 = vmatpush1.msra.mxu0 0.0
    %390 = vmatprep.subr.mxu0 0.0
    %391 = vmatpush1.msra.mxu0 0.0
    %392 = vmatprep.subr.mxu0 0.0
    %393 = vmatpush1.msra.mxu0 0.0
    %394 = vmatprep.subr.mxu0 0.0
    %395 = vmatpush1.msra.mxu0 0.0
    %396 = vmatprep.subr.mxu0 0.0
    %397 = vmatpush1.msra.mxu0 0.0
    %398 = vmatprep.subr.mxu0 0.0
    %399 = vmatpush1.msra.mxu0 0.0
    %400 = vmatprep.subr.mxu0 0.0
    %401 = vmatpush1.msra.mxu0 0.0
    %402 = vmatprep.subr.mxu0 0.0
    %403 = vmatpush1.msra.mxu0 0.0
    %404 = vmatprep.subr.mxu0 0.0
    %405 = vmatpush1.msra.mxu0 0.0
    %406 = vmatprep.subr.mxu0 0.0
    %407 = vmatpush1.msra.mxu0 0.0
    %408 = vmatprep.subr.mxu0 0.0
    %409 = vmatpush1.msra.mxu0 0.0
    %410 = vmatprep.subr.mxu0 0.0
    %411 = vmatpush1.msra.mxu0 0.0
    %412 = vmatprep.subr.mxu0 0.0
    %413 = vmatpush1.msra.mxu0 0.0
    %414 = vmatprep.mubr.f32.mxu0 0.0
    %415 = vmatmul.mubr.f32.gmra.mrb[0].mxu0 %v348
    %v416 = vpop.f32.mrb[0].mxu0
    %v417 = vadd.f32 %v342, %v416
    %v418 = vpop.f32.mrb[0].mxu0
    %419 = vdwg.mxu0
    %v420 = vlaneseq
    %v421 = vshrl.u32 %v420, 7
    %v422 = vsub.s32 0, %v421
    %v423 = vrot.slane %v52, %v422
    %v424 = vadd.f32 %v417, %v423
    %v425 = vmax.f32 %v424, 0.0
    %426 = vst.msk [vmem:[#allocation7] sm:$0x3] %vm191, %v425
    // Predicated region
    $region22: #{tpu_custom_call.1} parent=1 // pred_check
      _
    $region23: #{tpu_custom_call.1} parent=1 // pred_check_branch
      %428 = sbr.rel (0) target = $region25
    $region24: #{tpu_custom_call.1} parent=1 // pred_region
      %s430 = ssub.s32 32, 32
      %431 = vsyncadd [#allocation4], %s430
      %s433 = sshll.u32 [#allocation7], 4
      %s434 = int_to_ptr.vmem [resolvable:$true] %s433
      %436 = dma.vmem_to_hbm [thread:$0]  %s434, 32, %s3, [#allocation4]
    $region25: #{tpu_custom_call.1} parent=1 // pred_fallthru
      _
    // Predicated region
    $region26: #{tpu_custom_call.1} parent=1 // pred_check
      _
    $region27: #{tpu_custom_call.1} parent=1 // pred_check_branch
      %438 = sbr.rel (0) target = $region29
    $region28: #{tpu_custom_call.1} parent=1 // pred_region
      %439 = dma.done [#allocation4], 32
    $region29: #{tpu_custom_call.1} parent=1 // pred_fallthru
      _
    %440 = vsyncpa [#allocation3], 1
    %441 = vsyncpa [#allocation6], 1
    %442 = vsyncpa [#allocation4], 1

</llo_original>
